<compile_context>
chip_gen: v7x
topology: tpu7x:2x2x1
jax: 0.10.0
libtpu: 0.0.40
codegen_flags: <defaults>
</compile_context>

<pallas_src>
import jax
import jax.numpy as jnp
from jax.experimental import pallas as pl
from jax.experimental.pallas import tpu as pltpu


def dqn_kernel(x_ref, w1_ref, b1_ref, w2_ref, b2_ref, out_ref):
    # fc1: feature = relu(x @ W1 + b1)   (MXU matmul, VPU bias+relu, f32 accumulation)
    x = x_ref[...]
    h = jnp.dot(x, w1_ref[...], preferred_element_type=jnp.float32) + b1_ref[...]
    h = jnp.maximum(h, 0.0)
    # value_out: value = feature @ W2 + b2 (fused; hidden stays in VMEM/vregs)
    v = jnp.dot(h, w2_ref[...], preferred_element_type=jnp.float32) + b2_ref[...]
    out_ref[...] = v.astype(out_ref.dtype)


def _round_up(n, m):
    return pl.cdiv(n, m) * m


def dqn_forward(x, w1, b1, w2, b2, *, tb=128):
    """x: (B, S) or (S,) f32; w1: (S, S); b1: (1, S); w2: (S, A); b2: (1, A).

    Returns (B, A) f32 (or (A,) if x was 1-D), matching
    value_out(relu(fc1(x))) of the PyTorch DQN module.
    """
    squeeze_batch = x.ndim == 1
    if squeeze_batch:
        x = x[None, :]

    B, S = x.shape
    A = w2.shape[1]

    # Only the batch dim gets padded (so the grid divides evenly); feature dims
    # are used at their natural sizes as full-extent block dims.
    tb = min(tb, _round_up(B, 8))
    nb = pl.cdiv(B, tb)
    BP = nb * tb
    if BP != B:
        x = jnp.pad(x, ((0, BP - B), (0, 0)))

    flops = 2 * B * S * (S + A)
    bytes_accessed = 4 * (B * S + S * S + S + S * A + A + B * A)

    out = pl.pallas_call(
        dqn_kernel,
        out_shape=jax.ShapeDtypeStruct((BP, A), jnp.float32),
        grid=(nb,),
        in_specs=[
            pl.BlockSpec((tb, S), lambda i: (i, 0)),   # batch tile of states
            pl.BlockSpec((S, S), lambda i: (0, 0)),    # W1: VMEM-resident across steps
            pl.BlockSpec((1, S), lambda i: (0, 0)),    # b1
            pl.BlockSpec((S, A), lambda i: (0, 0)),    # W2: VMEM-resident across steps
            pl.BlockSpec((1, A), lambda i: (0, 0)),    # b2
        ],
        out_specs=pl.BlockSpec((tb, A), lambda i: (i, 0)),
        compiler_params=pltpu.CompilerParams(
            dimension_semantics=("parallel",)),        # independent batch tiles (megacore on v7x)
        cost_estimate=pl.CostEstimate(
            flops=flops, transcendentals=0, bytes_accessed=bytes_accessed),
    )(x, w1, b1, w2, b2)

    out = out[:B]
    if squeeze_batch:
        out = out[0]
    return out


def init_linear(key, fan_in, fan_out):
    # Mimics PyTorch nn.Linear default init: U(-1/sqrt(fan_in), 1/sqrt(fan_in)).
    kw, kb = jax.random.split(key)
    bound = 1.0 / jnp.sqrt(float(fan_in))
    w = jax.random.uniform(kw, (fan_in, fan_out), jnp.float32, -bound, bound)
    b = jax.random.uniform(kb, (1, fan_out), jnp.float32, -bound, bound)
    return w, b


if __name__ == "__main__":
    B = 96             # deliberately not a multiple of the batch tile -> exercises pad/slice path
    STATE_SIZE = 32
    ACTION_SIZE = 16
    TB = 64            # batch tile per grid step (multiple of 8)

    key = jax.random.PRNGKey(0)
    k_x, k_fc1, k_out = jax.random.split(key, 3)

    x = jax.random.normal(k_x, (B, STATE_SIZE), jnp.float32)
    w1, b1 = init_linear(k_fc1, STATE_SIZE, STATE_SIZE)    # fc1: Linear(S, S)
    w2, b2 = init_linear(k_out, STATE_SIZE, ACTION_SIZE)   # value_out: Linear(S, A)

    value = dqn_forward(x, w1, b1, w2, b2, tb=TB)
    jax.block_until_ready(value)

    # Reference check in plain JAX (same math as the PyTorch forward).
    ref = jnp.maximum(x @ w1 + b1, 0.0) @ w2 + b2
    assert value.shape == (B, ACTION_SIZE)
    assert jnp.allclose(value, ref, atol=1e-4, rtol=1e-4)

    print("KERNEL_OK")
</pallas_src>

<mosaic_0001>
module attributes {stable_mosaic.version = 11 : i64} {
  func.func @dqn_kernel(%arg0: i32, %arg1: memref<64x32xf32, #tpu.memory_space<vmem>>, %arg2: memref<32x32xf32, #tpu.memory_space<vmem>>, %arg3: memref<1x32xf32, #tpu.memory_space<vmem>>, %arg4: memref<32x16xf32, #tpu.memory_space<vmem>>, %arg5: memref<1x16xf32, #tpu.memory_space<vmem>>, %arg6: memref<64x16xf32, #tpu.memory_space<vmem>>) attributes {dimension_semantics = [#tpu.dimension_semantics<parallel>], iteration_bounds = array<i64: 2>, scalar_prefetch = 0 : i64, scratch_operands = 0 : i64, tpu.core_type = #tpu.core_type<tc>, window_params = [{transform_indices = @transform_0, window_bounds = array<i64: 64, 32>}, {pipeline_mode = #tpu.pipeline_mode<synchronous>, transform_indices = @transform_1, window_bounds = array<i64: 32, 32>}, {pipeline_mode = #tpu.pipeline_mode<synchronous>, transform_indices = @transform_2, window_bounds = array<i64: 1, 32>}, {pipeline_mode = #tpu.pipeline_mode<synchronous>, transform_indices = @transform_3, window_bounds = array<i64: 32, 16>}, {pipeline_mode = #tpu.pipeline_mode<synchronous>, transform_indices = @transform_4, window_bounds = array<i64: 1, 16>}, {transform_indices = @transform_5, window_bounds = array<i64: 64, 16>}]} {
    %c0 = arith.constant 0 : index
    %c0_0 = arith.constant 0 : index
    %0 = vector.load %arg1[%c0, %c0_0] : memref<64x32xf32, #tpu.memory_space<vmem>>, vector<64x32xf32>
    %c0_1 = arith.constant 0 : index
    %c0_2 = arith.constant 0 : index
    %1 = vector.load %arg2[%c0_1, %c0_2] : memref<32x32xf32, #tpu.memory_space<vmem>>, vector<32x32xf32>
    %cst = arith.constant dense<0.000000e+00> : vector<64x32xf32>
    %2 = tpu.matmul %0, %1, %cst {dimension_numbers = #tpu.dot_dimension_numbers<[1], [0], [0], [1], [0, 0, 1, 1], [], []>} : vector<64x32xf32>, vector<32x32xf32>, vector<64x32xf32> -> vector<64x32xf32>
    %c0_3 = arith.constant 0 : index
    %c0_4 = arith.constant 0 : index
    %3 = vector.load %arg3[%c0_3, %c0_4] : memref<1x32xf32, #tpu.memory_space<vmem>>, vector<1x32xf32>
    %4 = vector.broadcast %3 : vector<1x32xf32> to vector<64x32xf32>
    %5 = arith.addf %2, %4 : vector<64x32xf32>
    %cst_5 = arith.constant 0.000000e+00 : f32
    %6 = vector.broadcast %cst_5 : f32 to vector<64x32xf32>
    %7 = arith.maximumf %5, %6 : vector<64x32xf32>
    %c0_6 = arith.constant 0 : index
    %c0_7 = arith.constant 0 : index
    %8 = vector.load %arg4[%c0_6, %c0_7] : memref<32x16xf32, #tpu.memory_space<vmem>>, vector<32x16xf32>
    %cst_8 = arith.constant dense<0.000000e+00> : vector<64x16xf32>
    %9 = tpu.matmul %7, %8, %cst_8 {dimension_numbers = #tpu.dot_dimension_numbers<[1], [0], [0], [1], [0, 0, 1, 1], [], []>} : vector<64x32xf32>, vector<32x16xf32>, vector<64x16xf32> -> vector<64x16xf32>
    %c0_9 = arith.constant 0 : index
    %c0_10 = arith.constant 0 : index
    %10 = vector.load %arg5[%c0_9, %c0_10] : memref<1x16xf32, #tpu.memory_space<vmem>>, vector<1x16xf32>
    %11 = vector.broadcast %10 : vector<1x16xf32> to vector<64x16xf32>
    %12 = arith.addf %9, %11 : vector<64x16xf32>
    %c0_11 = arith.constant 0 : index
    %c0_12 = arith.constant 0 : index
    %13 = vector.load %arg6[%c0_11, %c0_12] : memref<64x16xf32, #tpu.memory_space<vmem>>, vector<64x16xf32>
    tpu.vector_store %arg6[%c0_11, %c0_12], %12 {strides = array<i32>} : memref<64x16xf32, #tpu.memory_space<vmem>>, vector<64x16xf32>,
    return
  }
  func.func @transform_0(%arg0: i32) -> (i32, i32) {
    %c0_i32 = arith.constant 0 : i32
    %c0_i32_0 = arith.constant 0 : i32
    return %arg0, %c0_i32 : i32, i32
  }
  func.func @transform_1(%arg0: i32) -> (i32, i32) {
    %c0_i32 = arith.constant 0 : i32
    %c0_i32_0 = arith.constant 0 : i32
    %c0_i32_1 = arith.constant 0 : i32
    return %c0_i32, %c0_i32_0 : i32, i32
  }
  func.func @transform_2(%arg0: i32) -> (i32, i32) {
    %c0_i32 = arith.constant 0 : i32
    %c0_i32_0 = arith.constant 0 : i32
    %c0_i32_1 = arith.constant 0 : i32
    return %c0_i32, %c0_i32_0 : i32, i32
  }
  func.func @transform_3(%arg0: i32) -> (i32, i32) {
    %c0_i32 = arith.constant 0 : i32
    %c0_i32_0 = arith.constant 0 : i32
    %c0_i32_1 = arith.constant 0 : i32
    return %c0_i32, %c0_i32_0 : i32, i32
  }
  func.func @transform_4(%arg0: i32) -> (i32, i32) {
    %c0_i32 = arith.constant 0 : i32
    %c0_i32_0 = arith.constant 0 : i32
    %c0_i32_1 = arith.constant 0 : i32
    return %c0_i32, %c0_i32_0 : i32, i32
  }
  func.func @transform_5(%arg0: i32) -> (i32, i32) {
    %c0_i32 = arith.constant 0 : i32
    %c0_i32_0 = arith.constant 0 : i32
    return %arg0, %c0_i32 : i32, i32
  }
}

</mosaic_0001>

<llo_original>
// kernel: tpu_custom_call.1
$region0: #{tpu_custom_call.1}
  #allocation0 [shape = 'u32[]', space=smem, size = 0x4, offset = 0x4, fixed_abs, tag = 'smem constant byte address 0x4 - core index']
  #allocation1 [shape = 'u32[144,128]{1,0:T(1,128)}', space=vmem, size = 0x12000, scoped, tag = 'internal scratch']
  %s0 = inlined_call_operand.vmem [shape: f32[128,32], index: 0, kind: input, shape index: {}]
  %s1 = inlined_call_operand.vmem [shape: f32[32,32], index: 1, kind: input, shape index: {}]
  %s2 = inlined_call_operand.vmem [shape: f32[1,32], index: 2, kind: input, shape index: {}]
  %s3 = inlined_call_operand.vmem [shape: f32[32,16], index: 3, kind: input, shape index: {}]
  %s4 = inlined_call_operand.vmem [shape: f32[1,16], index: 4, kind: input, shape index: {}]
  %s5 = inlined_call_operand.vmem [shape: f32[128,16], index: 5, kind: output, shape index: {}]
  %s6 = sld [smem:[#allocation0]]
  $region53: #{tpu_custom_call.1} parent=0
    _
  %s8 = ssub.s32 1, %s6
  %s9 = scalar_select 0, %s8, %s6
  loop: start=0, step=1, limit=4
  $region2: #{tpu_custom_call.1} parent=0 // loop_pre_header
    _
  $region3: #{tpu_custom_call.1} parent=0 // loop_header
    %s11 = sphi 0, %s15
    %p12 = scmp.ge.s32.totalorder %s11, 4
    %s21 = sphi 0, %s23
    %s24 = sphi 0, %s21
    %s25 = sphi 0, %s24
    %s41 = sphi 0, %s25
    %s45 = sphi 0, %s45
    %s47 = sphi 0, %s45
    %s48 = sphi 0, %s47
    %s62 = sphi 0, %s48
    %s66 = sphi 0, %s66
    %s68 = sphi 0, %s66
    %s69 = sphi 0, %s68
    %s83 = sphi 0, %s69
    %s87 = sphi 0, %s87
    %s89 = sphi 0, %s87
    %s90 = sphi 0, %s89
    %s104 = sphi 0, %s90
    %s108 = sphi 0, %s108
    %s110 = sphi 0, %s108
    %s111 = sphi 0, %s110
    %s125 = sphi 0, %s111
    %s131 = sphi 0, %s133
    %s134 = sphi 0, %s131
    %s135 = sphi 0, %s134
    %s151 = sphi 0, %s135
  $region4: #{tpu_custom_call.1} parent=0 // loop_header_branch
    %14 = sbr.rel (%p12) target = $region8
  $region5: #{tpu_custom_call.1} parent=0 // loop_body
    %s16 = ssub.s32 %s11, 1
    %s17 = ssub.s32 %s11, 2
    %s18 = sadd.s32 %s11, 1
    %s19 = ssub.s32 %s11, %s18
    %p20 = scmp.eq.s32.totalorder %s19, 0
    %s22 = sadd.s32 %s21, 1
    %s23 = scalar_select %p20, %s21, %s22
    %p26 = pneg %p20
    %p27 = scmp.eq.s32.totalorder %s11, 1
    %p28 = por %p26, %p27
    %p29 = scmp.ne.s32.totalorder %s21, %s24
    %p30 = scmp.eq.s32.totalorder %s11, 0
    %p31 = por %p29, %p30
    %p32 = scmp.ne.s32.totalorder %s21, %s24
    %p33 = scmp.eq.s32.totalorder %s16, 1
    %p34 = por %p32, %p33
    %p35 = scmp.ne.s32.totalorder %s24, %s25
    %p36 = scmp.eq.s32.totalorder %s16, 0
    %p37 = por %p35, %p36
    %p38 = scmp.ne.s32.totalorder %s24, %s25
    %p39 = scmp.eq.s32.totalorder %s17, 1
    %p40 = por %p38, %p39
    %p42 = scmp.ne.s32.totalorder %s25, %s41
    %p43 = scmp.eq.s32.totalorder %s17, 0
    %p44 = por %p42, %p43
    %s46 = sadd.s32 %s45, 1
    %p49 = scmp.eq.s32.totalorder %s11, 1
    %p50 = scmp.ne.s32.totalorder %s45, %s47
    %p51 = scmp.eq.s32.totalorder %s11, 0
    %p52 = por %p50, %p51
    %p53 = scmp.ne.s32.totalorder %s45, %s47
    %p54 = scmp.eq.s32.totalorder %s16, 1
    %p55 = por %p53, %p54
    %p56 = scmp.ne.s32.totalorder %s47, %s48
    %p57 = scmp.eq.s32.totalorder %s16, 0
    %p58 = por %p56, %p57
    %p59 = scmp.ne.s32.totalorder %s47, %s48
    %p60 = scmp.eq.s32.totalorder %s17, 1
    %p61 = por %p59, %p60
    %p63 = scmp.ne.s32.totalorder %s48, %s62
    %p64 = scmp.eq.s32.totalorder %s17, 0
    %p65 = por %p63, %p64
    %s67 = sadd.s32 %s66, 1
    %p70 = scmp.eq.s32.totalorder %s11, 1
    %p71 = scmp.ne.s32.totalorder %s66, %s68
    %p72 = scmp.eq.s32.totalorder %s11, 0
    %p73 = por %p71, %p72
    %p74 = scmp.ne.s32.totalorder %s66, %s68
    %p75 = scmp.eq.s32.totalorder %s16, 1
    %p76 = por %p74, %p75
    %p77 = scmp.ne.s32.totalorder %s68, %s69
    %p78 = scmp.eq.s32.totalorder %s16, 0
    %p79 = por %p77, %p78
    %p80 = scmp.ne.s32.totalorder %s68, %s69
    %p81 = scmp.eq.s32.totalorder %s17, 1
    %p82 = por %p80, %p81
    %p84 = scmp.ne.s32.totalorder %s69, %s83
    %p85 = scmp.eq.s32.totalorder %s17, 0
    %p86 = por %p84, %p85
    %s88 = sadd.s32 %s87, 1
    %p91 = scmp.eq.s32.totalorder %s11, 1
    %p92 = scmp.ne.s32.totalorder %s87, %s89
    %p93 = scmp.eq.s32.totalorder %s11, 0
    %p94 = por %p92, %p93
    %p95 = scmp.ne.s32.totalorder %s87, %s89
    %p96 = scmp.eq.s32.totalorder %s16, 1
    %p97 = por %p95, %p96
    %p98 = scmp.ne.s32.totalorder %s89, %s90
    %p99 = scmp.eq.s32.totalorder %s16, 0
    %p100 = por %p98, %p99
    %p101 = scmp.ne.s32.totalorder %s89, %s90
    %p102 = scmp.eq.s32.totalorder %s17, 1
    %p103 = por %p101, %p102
    %p105 = scmp.ne.s32.totalorder %s90, %s104
    %p106 = scmp.eq.s32.totalorder %s17, 0
    %p107 = por %p105, %p106
    %s109 = sadd.s32 %s108, 1
    %p112 = scmp.eq.s32.totalorder %s11, 1
    %p113 = scmp.ne.s32.totalorder %s108, %s110
    %p114 = scmp.eq.s32.totalorder %s11, 0
    %p115 = por %p113, %p114
    %p116 = scmp.ne.s32.totalorder %s108, %s110
    %p117 = scmp.eq.s32.totalorder %s16, 1
    %p118 = por %p116, %p117
    %p119 = scmp.ne.s32.totalorder %s110, %s111
    %p120 = scmp.eq.s32.totalorder %s16, 0
    %p121 = por %p119, %p120
    %p122 = scmp.ne.s32.totalorder %s110, %s111
    %p123 = scmp.eq.s32.totalorder %s17, 1
    %p124 = por %p122, %p123
    %p126 = scmp.ne.s32.totalorder %s111, %s125
    %p127 = scmp.eq.s32.totalorder %s17, 0
    %p128 = por %p126, %p127
    %s129 = ssub.s32 %s11, %s18
    %p130 = scmp.eq.s32.totalorder %s129, 0
    %s132 = sadd.s32 %s131, 1
    %s133 = scalar_select %p130, %s131, %s132
    %p136 = pneg %p130
    %p137 = scmp.eq.s32.totalorder %s11, 1
    %p138 = por %p136, %p137
    %p139 = scmp.ne.s32.totalorder %s131, %s134
    %p140 = scmp.eq.s32.totalorder %s11, 0
    %p141 = por %p139, %p140
    %p142 = scmp.ne.s32.totalorder %s131, %s134
    %p143 = scmp.eq.s32.totalorder %s16, 1
    %p144 = por %p142, %p143
    %p145 = scmp.ne.s32.totalorder %s134, %s135
    %p146 = scmp.eq.s32.totalorder %s16, 0
    %p147 = por %p145, %p146
    %p148 = scmp.ne.s32.totalorder %s134, %s135
    %p149 = scmp.eq.s32.totalorder %s17, 1
    %p150 = por %p148, %p149
    %p152 = scmp.ne.s32.totalorder %s135, %s151
    %p153 = scmp.eq.s32.totalorder %s17, 0
    %p154 = por %p152, %p153
    %p155 = scmp.le.s32.totalorder 1, %s11
    %p156 = scmp.lt.s32.totalorder %s11, 3
    %p157 = pnand %p155, %p156
    %p158 = pneg %p157
    // Predicated region
    $region9: #{tpu_custom_call.1} parent=5 // pred_check
      _
    $region10: #{tpu_custom_call.1} parent=5 // pred_check_branch
      %160 = sbr.rel (%p157) target = $region12
    $region11: #{tpu_custom_call.1} parent=5 // pred_region
      %s161 = ssub.s32 %s11, 1
      // Predicated region
      $region13: #{tpu_custom_call.1} parent=11 // pred_check
        %p162 = pneg %p58
      $region14: #{tpu_custom_call.1} parent=11 // pred_check_branch
        %164 = sbr.rel (%p162) target = $region16
      $region15: #{tpu_custom_call.1} parent=11 // pred_region
        _
      $region16: #{tpu_custom_call.1} parent=11 // pred_fallthru
        _
      // Predicated region
      $region17: #{tpu_custom_call.1} parent=11 // pred_check
        %p165 = pneg %p79
      $region18: #{tpu_custom_call.1} parent=11 // pred_check_branch
        %167 = sbr.rel (%p165) target = $region20
      $region19: #{tpu_custom_call.1} parent=11 // pred_region
        _
      $region20: #{tpu_custom_call.1} parent=11 // pred_fallthru
        _
      // Predicated region
      $region21: #{tpu_custom_call.1} parent=11 // pred_check
        %p168 = pneg %p100
      $region22: #{tpu_custom_call.1} parent=11 // pred_check_branch
        %170 = sbr.rel (%p168) target = $region24
      $region23: #{tpu_custom_call.1} parent=11 // pred_region
        _
      $region24: #{tpu_custom_call.1} parent=11 // pred_fallthru
        _
      // Predicated region
      $region25: #{tpu_custom_call.1} parent=11 // pred_check
        %p171 = pneg %p121
      $region26: #{tpu_custom_call.1} parent=11 // pred_check_branch
        %173 = sbr.rel (%p171) target = $region28
      $region27: #{tpu_custom_call.1} parent=11 // pred_region
        _
      $region28: #{tpu_custom_call.1} parent=11 // pred_fallthru
        _
    $region12: #{tpu_custom_call.1} parent=5 // pred_fallthru
      _
    %p174 = scmp.lt.s32.totalorder %s11, 2
    // Predicated region
    $region29: #{tpu_custom_call.1} parent=5 // pred_check
      %p175 = pneg %p174
    $region30: #{tpu_custom_call.1} parent=5 // pred_check_branch
      %177 = sbr.rel (%p175) target = $region32
    $region31: #{tpu_custom_call.1} parent=5 // pred_region
      // Predicated region
      $region33: #{tpu_custom_call.1} parent=31 // pred_check
        %p178 = pneg %p31
      $region34: #{tpu_custom_call.1} parent=31 // pred_check_branch
        %180 = sbr.rel (%p178) target = $region36
      $region35: #{tpu_custom_call.1} parent=31 // pred_region
        %s181 = smul.u32 8, %s11
        %p182 = scmp.lt.s32.totalorder %s181, 15
        %s183 = scalar_select %p182, %s181, 15
        %s184 = smul.addr %s183, 8
        %s185 = scalar_lea.vmem %s0, %s184
        %s186 = smul.u32 8, %s11
      $region36: #{tpu_custom_call.1} parent=31 // pred_fallthru
        _
    $region32: #{tpu_custom_call.1} parent=5 // pred_fallthru
      _
    %p187 = scmp.le.s32.totalorder 1, %s11
    %p188 = scmp.lt.s32.totalorder %s11, 3
    %p189 = pnand %p187, %p188
    %p190 = pneg %p189
    // Predicated region
    $region37: #{tpu_custom_call.1} parent=5 // pred_check
      _
    $region38: #{tpu_custom_call.1} parent=5 // pred_check_branch
      %192 = sbr.rel (%p189) target = $region40
    $region39: #{tpu_custom_call.1} parent=5 // pred_region
      %s193 = ssub.s32 %s11, 1
      %s194 = smul.u32 8, %s16
      %p195 = scmp.lt.s32.totalorder %s194, 15
      %s196 = scalar_select %p195, %s194, 15
      %s197 = smul.addr %s196, 8
      %s198 = scalar_lea.vmem %s0, %s197
      %p199 = pneg %p37
      %p200 = pneg %p34
      %p201 = pneg %p58
      %p202 = pneg %p55
      %p203 = pneg %p79
      %p204 = pneg %p76
      %p205 = pneg %p100
      %p206 = pneg %p97
      %p207 = pneg %p121
      %p208 = pneg %p118
      %p209 = pneg %p147
      %p210 = pneg %p144
      %s211 = smul.u32 8, %s16
      %p212 = scmp.lt.s32.totalorder %s211, 15
      %s213 = scalar_select %p212, %s211, 15
      %s214 = smul.addr %s213, 8
      %s215 = scalar_lea.vmem %s5, %s214
      %s216 = smul.u32 8, %s16
      %p217 = scmp.lt.s32.totalorder %s216, 15
      %s218 = scalar_select %p217, %s216, 15
      %s219 = smul.addr %s218, 8
      %s220 = scalar_lea.vmem %s0, %s219
      %s221 = smul.u32 8, %s16
      %s222 = smul.u32 8, %s16
      %p223 = scmp.lt.s32.totalorder %s222, 15
      %s224 = scalar_select %p223, %s222, 15
      %s225 = smul.addr %s224, 8
      %s226 = scalar_lea.vmem %s5, %s225
      %s227 = smul.u32 8, %s16
      %v228 = vld [vmem:[%s220] sm:$0xff]
      %v229 = vld [vmem:[%s220 + $0x8] sm:$0xff]
      %v230 = vld [vmem:[%s220 + $0x10] sm:$0xff]
      %v231 = vld [vmem:[%s220 + $0x18] sm:$0xff]
      %v232 = vld [vmem:[%s220 + $0x20] sm:$0xff]
      %v233 = vld [vmem:[%s220 + $0x28] sm:$0xff]
      %v234 = vld [vmem:[%s220 + $0x30] sm:$0xff]
      %v235 = vld [vmem:[%s220 + $0x38] sm:$0xff]
      %v236 = vld [vmem:[%s1] sm:$0xff]
      %v237 = vld [vmem:[%s1 + $0x8] sm:$0xff]
      %v238 = vld [vmem:[%s1 + $0x10] sm:$0xff]
      %v239 = vld [vmem:[%s1 + $0x18] sm:$0xff]
      %v240 = vld [vmem:[%s2] sm:$0x1]
      %v242 = vlaneseq
      %v243 = vshrl.u32 %v242, 7
      %v244 = vsub.s32 0, %v243
      %v245 = vrot.slane %v240, %v244
      %vm247 = vcmask 261120
      %v249 = vsel %vm247, %v228, 0
      %v252 = vsel %vm247, %v229, 0
      %v255 = vsel %vm247, %v230, 0
      %v258 = vsel %vm247, %v231, 0
      %v261 = vsel %vm247, %v232, 0
      %v264 = vsel %vm247, %v233, 0
      %v267 = vsel %vm247, %v234, 0
      %v270 = vsel %vm247, %v235, 0
      %272 = vmatprep.subr.mxu0 0.0
      %273 = vmatpush1.msra.mxu0 %v236
      %274 = vmatprep.subr.mxu0 0.0
      %275 = vmatpush1.msra.mxu0 %v237
      %276 = vmatprep.subr.mxu0 0.0
      %277 = vmatpush1.msra.mxu0 %v238
      %278 = vmatprep.subr.mxu0 0.0
      %279 = vmatpush1.msra.mxu0 %v239
      %280 = vmatprep.subr.mxu0 0.0
      %281 = vmatpush1.msra.mxu0 0.0
      %282 = vmatprep.subr.mxu0 0.0
      %283 = vmatpush1.msra.mxu0 0.0
      %284 = vmatprep.subr.mxu0 0.0
      %285 = vmatpush1.msra.mxu0 0.0
      %286 = vmatprep.subr.mxu0 0.0
      %287 = vmatpush1.msra.mxu0 0.0
      %288 = vmatprep.subr.mxu0 0.0
      %289 = vmatpush1.msra.mxu0 0.0
      %290 = vmatprep.subr.mxu0 0.0
      %291 = vmatpush1.msra.mxu0 0.0
      %292 = vmatprep.subr.mxu0 0.0
      %293 = vmatpush1.msra.mxu0 0.0
      %294 = vmatprep.subr.mxu0 0.0
      %295 = vmatpush1.msra.mxu0 0.0
      %296 = vmatprep.subr.mxu0 0.0
      %297 = vmatpush1.msra.mxu0 0.0
      %298 = vmatprep.subr.mxu0 0.0
      %299 = vmatpush1.msra.mxu0 0.0
      %300 = vmatprep.subr.mxu0 0.0
      %301 = vmatpush1.msra.mxu0 0.0
      %302 = vmatprep.subr.mxu0 0.0
      %303 = vmatpush1.msra.mxu0 0.0
      %304 = vmatprep.subr.mxu0 0.0
      %305 = vmatpush1.msra.mxu0 0.0
      %306 = vmatprep.subr.mxu0 0.0
      %307 = vmatpush1.msra.mxu0 0.0
      %308 = vmatprep.subr.mxu0 0.0
      %309 = vmatpush1.msra.mxu0 0.0
      %310 = vmatprep.subr.mxu0 0.0
      %311 = vmatpush1.msra.mxu0 0.0
      %312 = vmatprep.subr.mxu0 0.0
      %313 = vmatpush1.msra.mxu0 0.0
      %314 = vmatprep.subr.mxu0 0.0
      %315 = vmatpush1.msra.mxu0 0.0
      %316 = vmatprep.subr.mxu0 0.0
      %317 = vmatpush1.msra.mxu0 0.0
      %318 = vmatprep.subr.mxu0 0.0
      %319 = vmatpush1.msra.mxu0 0.0
      %320 = vmatprep.subr.mxu0 0.0
      %321 = vmatpush1.msra.mxu0 0.0
      %322 = vmatprep.subr.mxu0 0.0
      %323 = vmatpush1.msra.mxu0 0.0
      %324 = vmatprep.subr.mxu0 0.0
      %325 = vmatpush1.msra.mxu0 0.0
      %326 = vmatprep.subr.mxu0 0.0
      %327 = vmatpush1.msra.mxu0 0.0
      %328 = vmatprep.subr.mxu0 0.0
      %329 = vmatpush1.msra.mxu0 0.0
      %330 = vmatprep.subr.mxu0 0.0
      %331 = vmatpush1.msra.mxu0 0.0
      %332 = vmatprep.subr.mxu0 0.0
      %333 = vmatpush1.msra.mxu0 0.0
      %334 = vmatprep.subr.mxu0 0.0
      %335 = vmatpush1.msra.mxu0 0.0
      %336 = vmatprep.mubr.f32.mxu0 0.0
      %337 = vmatmul.mubr.f32.gmra.mrb[0].mxu0 %v249
      %v338 = vpop.f32.mrb[0].mxu0
      %v339 = vadd.f32 %v245, %v338
      %v340 = vpop.f32.mrb[0].mxu0
      %341 = vmatprep.mubr.f32.mxu0 0.0
      %342 = vmatmul.mubr.f32.gmra.mrb[0].mxu0 %v252
      %v343 = vpop.f32.mrb[0].mxu0
      %v344 = vadd.f32 %v245, %v343
      %v345 = vpop.f32.mrb[0].mxu0
      %346 = vmatprep.mubr.f32.mxu0 0.0
      %347 = vmatmul.mubr.f32.gmra.mrb[0].mxu0 %v255
      %v348 = vpop.f32.mrb[0].mxu0
      %v349 = vadd.f32 %v245, %v348
      %v350 = vpop.f32.mrb[0].mxu0
      %351 = vmatprep.mubr.f32.mxu0 0.0
      %352 = vmatmul.mubr.f32.gmra.mrb[0].mxu0 %v258
      %v353 = vpop.f32.mrb[0].mxu0
      %v354 = vadd.f32 %v245, %v353
      %v355 = vpop.f32.mrb[0].mxu0
      %356 = vmatprep.mubr.f32.mxu0 0.0
      %357 = vmatmul.mubr.f32.gmra.mrb[0].mxu0 %v261
      %v358 = vpop.f32.mrb[0].mxu0
      %v359 = vadd.f32 %v245, %v358
      %v360 = vpop.f32.mrb[0].mxu0
      %361 = vmatprep.mubr.f32.mxu0 0.0
      %362 = vmatmul.mubr.f32.gmra.mrb[0].mxu0 %v264
      %v363 = vpop.f32.mrb[0].mxu0
      %v364 = vadd.f32 %v245, %v363
      %v365 = vpop.f32.mrb[0].mxu0
      %366 = vmatprep.mubr.f32.mxu0 0.0
      %367 = vmatmul.mubr.f32.gmra.mrb[0].mxu0 %v267
      %v368 = vpop.f32.mrb[0].mxu0
      %v369 = vadd.f32 %v245, %v368
      %v370 = vpop.f32.mrb[0].mxu0
      %371 = vmatprep.mubr.f32.mxu0 0.0
      %372 = vmatmul.mubr.f32.gmra.mrb[0].mxu0 %v270
      %v373 = vpop.f32.mrb[0].mxu0
      %v374 = vadd.f32 %v245, %v373
      %v375 = vpop.f32.mrb[0].mxu0
      %376 = vdwg.mxu0
      %v377 = vmax.f32 %v339, 0.0
      %v378 = vmax.f32 %v344, 0.0
      %v379 = vmax.f32 %v349, 0.0
      %v380 = vmax.f32 %v354, 0.0
      %v381 = vmax.f32 %v359, 0.0
      %v382 = vmax.f32 %v364, 0.0
      %v383 = vmax.f32 %v369, 0.0
      %v384 = vmax.f32 %v374, 0.0
      %v385 = vld [vmem:[%s3] sm:$0xff]
      %v386 = vld [vmem:[%s3 + $0x8] sm:$0xff]
      %v387 = vld [vmem:[%s3 + $0x10] sm:$0xff]
      %v388 = vld [vmem:[%s3 + $0x18] sm:$0xff]
      %v389 = vld [vmem:[%s4] sm:$0x1]
      %v391 = vlaneseq
      %v392 = vshrl.u32 %v391, 7
      %v393 = vsub.s32 0, %v392
      %v394 = vrot.slane %v389, %v393
      %v397 = vsel %vm247, %v377, 0
      %v400 = vsel %vm247, %v378, 0
      %v403 = vsel %vm247, %v379, 0
      %v406 = vsel %vm247, %v380, 0
      %v409 = vsel %vm247, %v381, 0
      %v412 = vsel %vm247, %v382, 0
      %v415 = vsel %vm247, %v383, 0
      %v418 = vsel %vm247, %v384, 0
      %420 = vmatprep.subr.mxu0 0.0
      %421 = vmatpush1.msra.mxu0 %v385
      %422 = vmatprep.subr.mxu0 0.0
      %423 = vmatpush1.msra.mxu0 %v386
      %424 = vmatprep.subr.mxu0 0.0
      %425 = vmatpush1.msra.mxu0 %v387
      %426 = vmatprep.subr.mxu0 0.0
      %427 = vmatpush1.msra.mxu0 %v388
      %428 = vmatprep.subr.mxu0 0.0
      %429 = vmatpush1.msra.mxu0 0.0
      %430 = vmatprep.subr.mxu0 0.0
      %431 = vmatpush1.msra.mxu0 0.0
      %432 = vmatprep.subr.mxu0 0.0
      %433 = vmatpush1.msra.mxu0 0.0
      %434 = vmatprep.subr.mxu0 0.0
      %435 = vmatpush1.msra.mxu0 0.0
      %436 = vmatprep.subr.mxu0 0.0
      %437 = vmatpush1.msra.mxu0 0.0
      %438 = vmatprep.subr.mxu0 0.0
      %439 = vmatpush1.msra.mxu0 0.0
      %440 = vmatprep.subr.mxu0 0.0
      %441 = vmatpush1.msra.mxu0 0.0
      %442 = vmatprep.subr.mxu0 0.0
      %443 = vmatpush1.msra.mxu0 0.0
      %444 = vmatprep.subr.mxu0 0.0
      %445 = vmatpush1.msra.mxu0 0.0
      %446 = vmatprep.subr.mxu0 0.0
      %447 = vmatpush1.msra.mxu0 0.0
      %448 = vmatprep.subr.mxu0 0.0
      %449 = vmatpush1.msra.mxu0 0.0
      %450 = vmatprep.subr.mxu0 0.0
      %451 = vmatpush1.msra.mxu0 0.0
      %452 = vmatprep.subr.mxu0 0.0
      %453 = vmatpush1.msra.mxu0 0.0
      %454 = vmatprep.subr.mxu0 0.0
      %455 = vmatpush1.msra.mxu0 0.0
      %456 = vmatprep.subr.mxu0 0.0
      %457 = vmatpush1.msra.mxu0 0.0
      %458 = vmatprep.subr.mxu0 0.0
      %459 = vmatpush1.msra.mxu0 0.0
      %460 = vmatprep.subr.mxu0 0.0
      %461 = vmatpush1.msra.mxu0 0.0
      %462 = vmatprep.subr.mxu0 0.0
      %463 = vmatpush1.msra.mxu0 0.0
      %464 = vmatprep.subr.mxu0 0.0
      %465 = vmatpush1.msra.mxu0 0.0
      %466 = vmatprep.subr.mxu0 0.0
      %467 = vmatpush1.msra.mxu0 0.0
      %468 = vmatprep.subr.mxu0 0.0
      %469 = vmatpush1.msra.mxu0 0.0
      %470 = vmatprep.subr.mxu0 0.0
      %471 = vmatpush1.msra.mxu0 0.0
      %472 = vmatprep.subr.mxu0 0.0
      %473 = vmatpush1.msra.mxu0 0.0
      %474 = vmatprep.subr.mxu0 0.0
      %475 = vmatpush1.msra.mxu0 0.0
      %476 = vmatprep.subr.mxu0 0.0
      %477 = vmatpush1.msra.mxu0 0.0
      %478 = vmatprep.subr.mxu0 0.0
      %479 = vmatpush1.msra.mxu0 0.0
      %480 = vmatprep.subr.mxu0 0.0
      %481 = vmatpush1.msra.mxu0 0.0
      %482 = vmatprep.subr.mxu0 0.0
      %483 = vmatpush1.msra.mxu0 0.0
      %484 = vmatprep.mubr.f32.mxu0 0.0
      %485 = vmatmul.mubr.f32.gmra.mrb[0].mxu0 %v397
      %v486 = vpop.f32.mrb[0].mxu0
      %v487 = vadd.f32 %v394, %v486
      %v488 = vpop.f32.mrb[0].mxu0
      %489 = vmatprep.mubr.f32.mxu0 0.0
      %490 = vmatmul.mubr.f32.gmra.mrb[0].mxu0 %v400
      %v491 = vpop.f32.mrb[0].mxu0
      %v492 = vadd.f32 %v394, %v491
      %v493 = vpop.f32.mrb[0].mxu0
      %494 = vmatprep.mubr.f32.mxu0 0.0
      %495 = vmatmul.mubr.f32.gmra.mrb[0].mxu0 %v403
      %v496 = vpop.f32.mrb[0].mxu0
      %v497 = vadd.f32 %v394, %v496
      %v498 = vpop.f32.mrb[0].mxu0
      %499 = vmatprep.mubr.f32.mxu0 0.0
      %500 = vmatmul.mubr.f32.gmra.mrb[0].mxu0 %v406
      %v501 = vpop.f32.mrb[0].mxu0
      %v502 = vadd.f32 %v394, %v501
      %v503 = vpop.f32.mrb[0].mxu0
      %504 = vmatprep.mubr.f32.mxu0 0.0
      %505 = vmatmul.mubr.f32.gmra.mrb[0].mxu0 %v409
      %v506 = vpop.f32.mrb[0].mxu0
      %v507 = vadd.f32 %v394, %v506
      %v508 = vpop.f32.mrb[0].mxu0
      %509 = vmatprep.mubr.f32.mxu0 0.0
      %510 = vmatmul.mubr.f32.gmra.mrb[0].mxu0 %v412
      %v511 = vpop.f32.mrb[0].mxu0
      %v512 = vadd.f32 %v394, %v511
      %v513 = vpop.f32.mrb[0].mxu0
      %514 = vmatprep.mubr.f32.mxu0 0.0
      %515 = vmatmul.mubr.f32.gmra.mrb[0].mxu0 %v415
      %v516 = vpop.f32.mrb[0].mxu0
      %v517 = vadd.f32 %v394, %v516
      %v518 = vpop.f32.mrb[0].mxu0
      %519 = vmatprep.mubr.f32.mxu0 0.0
      %520 = vmatmul.mubr.f32.gmra.mrb[0].mxu0 %v418
      %v521 = vpop.f32.mrb[0].mxu0
      %v522 = vadd.f32 %v394, %v521
      %v523 = vpop.f32.mrb[0].mxu0
      %524 = vdwg.mxu0
      %vm525 = vcmask 130048
      %526 = vst.msk [vmem:[%s226] sm:$0xff] %vm525, %v487
      %527 = vst.msk [vmem:[%s226 + $0x8] sm:$0xff] %vm525, %v492
      %528 = vst.msk [vmem:[%s226 + $0x10] sm:$0xff] %vm525, %v497
      %529 = vst.msk [vmem:[%s226 + $0x18] sm:$0xff] %vm525, %v502
      %530 = vst.msk [vmem:[%s226 + $0x20] sm:$0xff] %vm525, %v507
      %531 = vst.msk [vmem:[%s226 + $0x28] sm:$0xff] %vm525, %v512
      %532 = vst.msk [vmem:[%s226 + $0x30] sm:$0xff] %vm525, %v517
      %533 = vst.msk [vmem:[%s226 + $0x38] sm:$0xff] %vm525, %v522
      %s534 = smul.u32 8, %s16
      %p535 = scmp.lt.s32.totalorder %s534, 15
      %s536 = scalar_select %p535, %s534, 15
      %s537 = smul.addr %s536, 8
      %s538 = scalar_lea.vmem %s5, %s537
      // Predicated region
      $region41: #{tpu_custom_call.1} parent=39 // pred_check
        %p539 = pneg %p144
      $region42: #{tpu_custom_call.1} parent=39 // pred_check_branch
        %541 = sbr.rel (%p539) target = $region44
      $region43: #{tpu_custom_call.1} parent=39 // pred_region
        %s542 = smul.u32 8, %s16
      $region44: #{tpu_custom_call.1} parent=39 // pred_fallthru
        _
    $region40: #{tpu_custom_call.1} parent=5 // pred_fallthru
      _
    %p543 = scmp.le.s32.totalorder 2, %s11
    // Predicated region
    $region45: #{tpu_custom_call.1} parent=5 // pred_check
      %p544 = pneg %p543
    $region46: #{tpu_custom_call.1} parent=5 // pred_check_branch
      %546 = sbr.rel (%p544) target = $region48
    $region47: #{tpu_custom_call.1} parent=5 // pred_region
      %s547 = ssub.s32 %s11, 2
      // Predicated region
      $region49: #{tpu_custom_call.1} parent=47 // pred_check
        %p548 = pneg %p150
      $region50: #{tpu_custom_call.1} parent=47 // pred_check_branch
        %550 = sbr.rel (%p548) target = $region52
      $region51: #{tpu_custom_call.1} parent=47 // pred_region
        %s551 = smul.u32 8, %s17
        %p552 = scmp.lt.s32.totalorder %s551, 15
        %s553 = scalar_select %p552, %s551, 15
        %s554 = smul.addr %s553, 8
        %s555 = scalar_lea.vmem %s5, %s554
      $region52: #{tpu_custom_call.1} parent=47 // pred_fallthru
        _
    $region48: #{tpu_custom_call.1} parent=5 // pred_fallthru
      _
  $region6: #{tpu_custom_call.1} parent=0 // loop_footer
    %s15 = sadd.s32 1, %s11
  $region7: #{tpu_custom_call.1} parent=0 // loop_footer_branch
    %10 = sbr.rel target = $region3
  $region8: #{tpu_custom_call.1} parent=0 // loop_exit
    _

</llo_original>
